<compile_context>
chip_gen: v6e
topology: v6e:2x2x1
jax: 0.10.0
libtpu: 0.0.40
codegen_flags: <defaults>
</compile_context>

<pallas_src>
import jax
import jax.numpy as jnp
from jax.experimental import pallas as pl
from jax.experimental.pallas import tpu as pltpu

LN_EPS = 1e-5  # torch.nn.LayerNorm default


def _round_up(x, m):
  return ((x + m - 1) // m) * m


def quality_regressor_kernel(feat_ref, pose_ref, w1_ref, w2_ref, w3_ref,
                             w4_ref, pvec_ref, out_ref):
  feat = feat_ref[...].astype(jnp.float32)   # [TB, c1]
  pose = pose_ref[...].astype(jnp.float32)   # [TB, c2]
  c1 = feat.shape[1]
  c2 = pose.shape[1]
  hid = w1_ref.shape[1]
  h2 = w4_ref.shape[1]
  d = c1 + c2

  pv = pvec_ref[...]                         # [16, 128] packed small params

  def prow(r, n):                            # [1, n] slice of packed row r
    return pv[r:r + 1, :n]

  ln1_gf, ln1_gp = prow(0, c1), prow(1, c2)
  ln1_bf, ln1_bp = prow(2, c1), prow(3, c2)
  b1 = prow(4, hid)
  b2 = prow(5, c1)
  ln2_gf, ln2_gp = prow(6, c1), prow(7, c2)
  ln2_bf, ln2_bp = prow(8, c1), prow(9, c2)
  b3 = prow(10, hid)
  b4 = prow(11, h2)
  w5_row = prow(12, h2)
  b5 = prow(13, 1)

  # Split-K views of the concat-input weights (row offset c1=64 is a multiple
  # of 8 sublanes -> free static slices, no relayout).
  w1f, w1p = w1_ref[:c1, :], w1_ref[c1:, :]
  w3f, w3p = w3_ref[:c1, :], w3_ref[c1:, :]

  def layer_norm_split(a, b, gf, gp, bf, bp):
    # LayerNorm over the virtual concat([a, b], -1); returns the two
    # normalized halves separately (the concat is never materialized).
    s = jnp.sum(a, -1, keepdims=True) + jnp.sum(b, -1, keepdims=True)
    mean = s / d
    da, db = a - mean, b - mean
    var = (jnp.sum(da * da, -1, keepdims=True)
           + jnp.sum(db * db, -1, keepdims=True)) / d
    inv = jax.lax.rsqrt(var + LN_EPS)
    return da * inv * gf + bf, db * inv * gp + bp

  # ---- attention branch: LN -> Linear -> ReLU -> Linear -> Sigmoid ----
  na, nb = layer_norm_split(feat, pose, ln1_gf, ln1_gp, ln1_bf, ln1_bp)
  h = (jnp.dot(na, w1f, preferred_element_type=jnp.float32)
       + jnp.dot(nb, w1p, preferred_element_type=jnp.float32) + b1)
  h = jnp.maximum(h, 0.0)
  att = jax.nn.sigmoid(
      jnp.dot(h, w2_ref[...], preferred_element_type=jnp.float32) + b2)

  # ---- attention-gated residual on the image features ----
  gated = feat * att                                          # [TB, c1]

  # ---- MLP head: LN -> Linear -> ReLU -> Linear -> ReLU -> Linear ----
  ma, mb = layer_norm_split(gated, pose, ln2_gf, ln2_gp, ln2_bf, ln2_bp)
  m = (jnp.dot(ma, w3f, preferred_element_type=jnp.float32)
       + jnp.dot(mb, w3p, preferred_element_type=jnp.float32) + b3)
  m = jnp.maximum(m, 0.0)
  m = jnp.dot(m, w4_ref[...], preferred_element_type=jnp.float32) + b4
  m = jnp.maximum(m, 0.0)

  # Final out_c=1 layer as a VPU multiply + lane-reduce (avoids an N=1 matmul).
  y = jnp.sum(m * w5_row, axis=-1, keepdims=True) + b5

  # ---- QualityRegressor final Sigmoid ----
  out_ref[...] = jax.nn.sigmoid(y).astype(out_ref.dtype)


def init_params(key, in_c1=64, in_c2=32, hid=128, out_c=1):
  d = in_c1 + in_c2
  h2 = hid // 2
  ks = jax.random.split(key, 10)
  norm = lambda k, shape, scale: scale * jax.random.normal(k, shape, jnp.float32)
  return {
      "ln1_g": jnp.ones((d,), jnp.float32), "ln1_b": jnp.zeros((d,), jnp.float32),
      "w1": norm(ks[0], (d, hid), 0.08),   "b1": norm(ks[1], (hid,), 0.02),
      "w2": norm(ks[2], (hid, in_c1), 0.08), "b2": norm(ks[3], (in_c1,), 0.02),
      "ln2_g": jnp.ones((d,), jnp.float32), "ln2_b": jnp.zeros((d,), jnp.float32),
      "w3": norm(ks[4], (d, hid), 0.08),   "b3": norm(ks[5], (hid,), 0.02),
      "w4": norm(ks[6], (hid, h2), 0.08),  "b4": norm(ks[7], (h2,), 0.02),
      "w5": norm(ks[8], (h2, out_c), 0.08), "b5": norm(ks[9], (out_c,), 0.02),
  }


def pack_params(params, in_c1=64):
  """One-time parameter packing. Call this OUTSIDE the per-step hot path."""
  c1 = in_c1
  d, hid = params["w1"].shape
  h2 = params["w4"].shape[1]
  c2 = d - c1
  width = _round_up(max(hid, c1, c2, h2, 1), 128)

  def row(v):
    v = jnp.asarray(v, jnp.float32).reshape(-1)
    return jnp.pad(v, (0, width - v.shape[0]))

  rows = [
      params["ln1_g"][:c1], params["ln1_g"][c1:],
      params["ln1_b"][:c1], params["ln1_b"][c1:],
      params["b1"], params["b2"],
      params["ln2_g"][:c1], params["ln2_g"][c1:],
      params["ln2_b"][:c1], params["ln2_b"][c1:],
      params["b3"], params["b4"],
      params["w5"].reshape(-1), params["b5"],
  ]
  pvec = jnp.stack([row(r) for r in rows], axis=0)             # [14, 128]
  n_rows = _round_up(pvec.shape[0], 8)
  pvec = jnp.pad(pvec, ((0, n_rows - pvec.shape[0]), (0, 0)))  # [16, 128]
  return {
      "w1": jnp.asarray(params["w1"], jnp.float32),
      "w2": jnp.asarray(params["w2"], jnp.float32),
      "w3": jnp.asarray(params["w3"], jnp.float32),
      "w4": jnp.asarray(params["w4"], jnp.float32),
      "pvec": pvec,
  }


@jax.jit
def quality_regressor(features, pose_2d, packed):
  """features: [B, 64], pose_2d: [B, c2], packed: output of pack_params()."""
  B, c1 = features.shape
  c2 = pose_2d.shape[1]
  w1, w2, w3, w4, pvec = (packed["w1"], packed["w2"], packed["w3"],
                          packed["w4"], packed["pvec"])
  d, hid = w1.shape
  h2 = w4.shape[1]

  # Batch tiling: multiple of 8 sublanes, capped at 256 rows per grid step
  # (amortizes per-step overhead; still >=2 tiles for megacore once B>=512).
  TB = min(256, _round_up(B, 8))
  B_pad = _round_up(B, TB)
  feat = features.astype(jnp.float32)
  pose = pose_2d.astype(jnp.float32)
  if B_pad != B:
    feat = jnp.pad(feat, ((0, B_pad - B), (0, 0)))
    pose = jnp.pad(pose, ((0, B_pad - B), (0, 0)))

  out = pl.pallas_call(
      quality_regressor_kernel,
      out_shape=jax.ShapeDtypeStruct((B_pad, 1), jnp.float32),
      grid=(B_pad // TB,),
      in_specs=[
          pl.BlockSpec((TB, c1), lambda i: (i, 0)),     # features (tiled over batch)
          pl.BlockSpec((TB, c2), lambda i: (i, 0)),     # pose_2d  (tiled over batch)
          pl.BlockSpec((d, hid), lambda i: (0, 0)),     # w1 (resident across steps)
          pl.BlockSpec((hid, c1), lambda i: (0, 0)),    # w2
          pl.BlockSpec((d, hid), lambda i: (0, 0)),     # w3
          pl.BlockSpec((hid, h2), lambda i: (0, 0)),    # w4
          pl.BlockSpec(pvec.shape, lambda i: (0, 0)),   # packed biases/LN/w5
      ],
      out_specs=pl.BlockSpec((TB, 1), lambda i: (i, 0)),
      compiler_params=pltpu.CompilerParams(
          dimension_semantics=("parallel",)),
  )(feat, pose, w1, w2, w3, w4, pvec)
  return out[:B]


def reference(features, pose_2d, p):
  """Pure-JAX reference matching the assumed PyTorch forward."""
  def ln(x, g, b):
    mean = x.mean(-1, keepdims=True)
    var = ((x - mean) ** 2).mean(-1, keepdims=True)
    return (x - mean) / jnp.sqrt(var + LN_EPS) * g + b
  cat = jnp.concatenate([features, pose_2d], -1)
  h = jnp.maximum(ln(cat, p["ln1_g"], p["ln1_b"]) @ p["w1"] + p["b1"], 0.0)
  att = jax.nn.sigmoid(h @ p["w2"] + p["b2"])
  cat2 = jnp.concatenate([features * att, pose_2d], -1)
  m = jnp.maximum(ln(cat2, p["ln2_g"], p["ln2_b"]) @ p["w3"] + p["b3"], 0.0)
  m = jnp.maximum(m @ p["w4"] + p["b4"], 0.0)
  return jax.nn.sigmoid(m @ p["w5"] + p["b5"])


if __name__ == "__main__":
  B, IN_C1, IN_C2 = 8, 64, 32
  key = jax.random.PRNGKey(0)
  k_feat, k_pose, k_par = jax.random.split(key, 3)
  features = jax.random.normal(k_feat, (B, IN_C1), jnp.float32)
  pose_2d = jax.random.normal(k_pose, (B, IN_C2), jnp.float32)
  params = init_params(k_par, in_c1=IN_C1, in_c2=IN_C2)

  # One-time param packing (hoisted out of the jitted hot path).
  packed = pack_params(params, in_c1=IN_C1)
  packed = jax.block_until_ready(packed)

  out = quality_regressor(features, pose_2d, packed)
  out = jax.block_until_ready(out)

  ref = reference(features, pose_2d, params)
  assert out.shape == (B, 1)
  assert bool(jnp.all(jnp.isfinite(out)))
  assert jnp.allclose(out, ref, atol=1e-4, rtol=1e-4), (out, ref)
  print("KERNEL_OK")
</pallas_src>

<mosaic_0001>
module attributes {stable_mosaic.version = 11 : i64} {
  func.func @quality_regressor_kernel(%arg0: i32, %arg1: memref<8x64xf32, #tpu.memory_space<vmem>>, %arg2: memref<8x32xf32, #tpu.memory_space<vmem>>, %arg3: memref<96x128xf32, #tpu.memory_space<vmem>>, %arg4: memref<128x64xf32, #tpu.memory_space<vmem>>, %arg5: memref<96x128xf32, #tpu.memory_space<vmem>>, %arg6: memref<128x64xf32, #tpu.memory_space<vmem>>, %arg7: memref<16x128xf32, #tpu.memory_space<vmem>>, %arg8: memref<8x1xf32, #tpu.memory_space<vmem>>) attributes {dimension_semantics = [#tpu.dimension_semantics<parallel>], iteration_bounds = array<i64: 1>, scalar_prefetch = 0 : i64, scratch_operands = 0 : i64, tpu.core_type = #tpu.core_type<tc>, window_params = [{transform_indices = @transform_0, window_bounds = array<i64: 8, 64>}, {transform_indices = @transform_1, window_bounds = array<i64: 8, 32>}, {pipeline_mode = #tpu.pipeline_mode<synchronous>, transform_indices = @transform_2, window_bounds = array<i64: 96, 128>}, {pipeline_mode = #tpu.pipeline_mode<synchronous>, transform_indices = @transform_3, window_bounds = array<i64: 128, 64>}, {pipeline_mode = #tpu.pipeline_mode<synchronous>, transform_indices = @transform_4, window_bounds = array<i64: 96, 128>}, {pipeline_mode = #tpu.pipeline_mode<synchronous>, transform_indices = @transform_5, window_bounds = array<i64: 128, 64>}, {pipeline_mode = #tpu.pipeline_mode<synchronous>, transform_indices = @transform_6, window_bounds = array<i64: 16, 128>}, {transform_indices = @transform_7, window_bounds = array<i64: 8, 1>}]} {
    %c0 = arith.constant 0 : index
    %c0_0 = arith.constant 0 : index
    %0 = vector.load %arg1[%c0, %c0_0] : memref<8x64xf32, #tpu.memory_space<vmem>>, vector<8x64xf32>
    %c0_1 = arith.constant 0 : index
    %c0_2 = arith.constant 0 : index
    %1 = vector.load %arg2[%c0_1, %c0_2] : memref<8x32xf32, #tpu.memory_space<vmem>>, vector<8x32xf32>
    %c0_3 = arith.constant 0 : index
    %c0_4 = arith.constant 0 : index
    %2 = vector.load %arg7[%c0_3, %c0_4] : memref<16x128xf32, #tpu.memory_space<vmem>>, vector<16x128xf32>
    %3 = vector.extract_strided_slice %2 {offsets = [0, 0], sizes = [1, 64], strides = [1, 1]} : vector<16x128xf32> to vector<1x64xf32>
    %4 = vector.extract_strided_slice %2 {offsets = [1, 0], sizes = [1, 32], strides = [1, 1]} : vector<16x128xf32> to vector<1x32xf32>
    %5 = vector.extract_strided_slice %2 {offsets = [2, 0], sizes = [1, 64], strides = [1, 1]} : vector<16x128xf32> to vector<1x64xf32>
    %6 = vector.extract_strided_slice %2 {offsets = [3, 0], sizes = [1, 32], strides = [1, 1]} : vector<16x128xf32> to vector<1x32xf32>
    %7 = vector.extract_strided_slice %2 {offsets = [4, 0], sizes = [1, 128], strides = [1, 1]} : vector<16x128xf32> to vector<1x128xf32>
    %8 = vector.extract_strided_slice %2 {offsets = [5, 0], sizes = [1, 64], strides = [1, 1]} : vector<16x128xf32> to vector<1x64xf32>
    %9 = vector.extract_strided_slice %2 {offsets = [6, 0], sizes = [1, 64], strides = [1, 1]} : vector<16x128xf32> to vector<1x64xf32>
    %10 = vector.extract_strided_slice %2 {offsets = [7, 0], sizes = [1, 32], strides = [1, 1]} : vector<16x128xf32> to vector<1x32xf32>
    %11 = vector.extract_strided_slice %2 {offsets = [8, 0], sizes = [1, 64], strides = [1, 1]} : vector<16x128xf32> to vector<1x64xf32>
    %12 = vector.extract_strided_slice %2 {offsets = [9, 0], sizes = [1, 32], strides = [1, 1]} : vector<16x128xf32> to vector<1x32xf32>
    %13 = vector.extract_strided_slice %2 {offsets = [10, 0], sizes = [1, 128], strides = [1, 1]} : vector<16x128xf32> to vector<1x128xf32>
    %14 = vector.extract_strided_slice %2 {offsets = [11, 0], sizes = [1, 64], strides = [1, 1]} : vector<16x128xf32> to vector<1x64xf32>
    %15 = vector.extract_strided_slice %2 {offsets = [12, 0], sizes = [1, 64], strides = [1, 1]} : vector<16x128xf32> to vector<1x64xf32>
    %16 = vector.extract_strided_slice %2 {offsets = [13, 0], sizes = [1, 1], strides = [1, 1]} : vector<16x128xf32> to vector<1x1xf32>
    %c0_5 = arith.constant 0 : index
    %c0_6 = arith.constant 0 : index
    %17 = vector.load %arg3[%c0_5, %c0_6] : memref<96x128xf32, #tpu.memory_space<vmem>>, vector<64x128xf32>
    %c64 = arith.constant 64 : index
    %c0_7 = arith.constant 0 : index
    %18 = vector.load %arg3[%c64, %c0_7] : memref<96x128xf32, #tpu.memory_space<vmem>>, vector<32x128xf32>
    %c0_8 = arith.constant 0 : index
    %c0_9 = arith.constant 0 : index
    %19 = vector.load %arg5[%c0_8, %c0_9] : memref<96x128xf32, #tpu.memory_space<vmem>>, vector<64x128xf32>
    %c64_10 = arith.constant 64 : index
    %c0_11 = arith.constant 0 : index
    %20 = vector.load %arg5[%c64_10, %c0_11] : memref<96x128xf32, #tpu.memory_space<vmem>>, vector<32x128xf32>
    %cst = arith.constant dense<0.000000e+00> : vector<8xf32>
    %21 = vector.multi_reduction <add>, %0, %cst [1] : vector<8x64xf32> to vector<8xf32>
    %22 = vector.shape_cast %21 : vector<8xf32> to vector<8x1xf32>
    %cst_12 = arith.constant dense<0.000000e+00> : vector<8xf32>
    %23 = vector.multi_reduction <add>, %1, %cst_12 [1] : vector<8x32xf32> to vector<8xf32>
    %24 = vector.shape_cast %23 : vector<8xf32> to vector<8x1xf32>
    %25 = arith.addf %22, %24 : vector<8x1xf32>
    %cst_13 = arith.constant 9.600000e+01 : f32
    %26 = vector.broadcast %cst_13 : f32 to vector<8x1xf32>
    %27 = arith.divf %25, %26 : vector<8x1xf32>
    %28 = vector.broadcast %27 : vector<8x1xf32> to vector<8x64xf32>
    %29 = arith.subf %0, %28 : vector<8x64xf32>
    %30 = vector.broadcast %27 : vector<8x1xf32> to vector<8x32xf32>
    %31 = arith.subf %1, %30 : vector<8x32xf32>
    %32 = arith.mulf %29, %29 : vector<8x64xf32>
    %cst_14 = arith.constant dense<0.000000e+00> : vector<8xf32>
    %33 = vector.multi_reduction <add>, %32, %cst_14 [1] : vector<8x64xf32> to vector<8xf32>
    %34 = vector.shape_cast %33 : vector<8xf32> to vector<8x1xf32>
    %35 = arith.mulf %31, %31 : vector<8x32xf32>
    %cst_15 = arith.constant dense<0.000000e+00> : vector<8xf32>
    %36 = vector.multi_reduction <add>, %35, %cst_15 [1] : vector<8x32xf32> to vector<8xf32>
    %37 = vector.shape_cast %36 : vector<8xf32> to vector<8x1xf32>
    %38 = arith.addf %34, %37 : vector<8x1xf32>
    %cst_16 = arith.constant 9.600000e+01 : f32
    %39 = vector.broadcast %cst_16 : f32 to vector<8x1xf32>
    %40 = arith.divf %38, %39 : vector<8x1xf32>
    %cst_17 = arith.constant 9.99999974E-6 : f32
    %41 = vector.broadcast %cst_17 : f32 to vector<8x1xf32>
    %42 = arith.addf %40, %41 : vector<8x1xf32>
    %43 = math.rsqrt %42 : vector<8x1xf32>
    %44 = vector.broadcast %43 : vector<8x1xf32> to vector<8x64xf32>
    %45 = arith.mulf %29, %44 : vector<8x64xf32>
    %46 = vector.broadcast %3 : vector<1x64xf32> to vector<8x64xf32>
    %47 = arith.mulf %45, %46 : vector<8x64xf32>
    %48 = vector.broadcast %5 : vector<1x64xf32> to vector<8x64xf32>
    %49 = arith.addf %47, %48 : vector<8x64xf32>
    %50 = vector.broadcast %43 : vector<8x1xf32> to vector<8x32xf32>
    %51 = arith.mulf %31, %50 : vector<8x32xf32>
    %52 = vector.broadcast %4 : vector<1x32xf32> to vector<8x32xf32>
    %53 = arith.mulf %51, %52 : vector<8x32xf32>
    %54 = vector.broadcast %6 : vector<1x32xf32> to vector<8x32xf32>
    %55 = arith.addf %53, %54 : vector<8x32xf32>
    %cst_18 = arith.constant dense<0.000000e+00> : vector<8x128xf32>
    %56 = tpu.matmul %49, %17, %cst_18 {dimension_numbers = #tpu.dot_dimension_numbers<[1], [0], [0], [1], [0, 0, 1, 1], [], []>} : vector<8x64xf32>, vector<64x128xf32>, vector<8x128xf32> -> vector<8x128xf32>
    %cst_19 = arith.constant dense<0.000000e+00> : vector<8x128xf32>
    %57 = tpu.matmul %55, %18, %cst_19 {dimension_numbers = #tpu.dot_dimension_numbers<[1], [0], [0], [1], [0, 0, 1, 1], [], []>} : vector<8x32xf32>, vector<32x128xf32>, vector<8x128xf32> -> vector<8x128xf32>
    %58 = arith.addf %56, %57 : vector<8x128xf32>
    %59 = vector.broadcast %7 : vector<1x128xf32> to vector<8x128xf32>
    %60 = arith.addf %58, %59 : vector<8x128xf32>
    %cst_20 = arith.constant 0.000000e+00 : f32
    %61 = vector.broadcast %cst_20 : f32 to vector<8x128xf32>
    %62 = arith.maximumf %60, %61 : vector<8x128xf32>
    %c0_21 = arith.constant 0 : index
    %c0_22 = arith.constant 0 : index
    %63 = vector.load %arg4[%c0_21, %c0_22] : memref<128x64xf32, #tpu.memory_space<vmem>>, vector<128x64xf32>
    %cst_23 = arith.constant dense<0.000000e+00> : vector<8x64xf32>
    %64 = tpu.matmul %62, %63, %cst_23 {dimension_numbers = #tpu.dot_dimension_numbers<[1], [0], [0], [1], [0, 0, 1, 1], [], []>} : vector<8x128xf32>, vector<128x64xf32>, vector<8x64xf32> -> vector<8x64xf32>
    %65 = vector.broadcast %8 : vector<1x64xf32> to vector<8x64xf32>
    %66 = arith.addf %64, %65 : vector<8x64xf32>
    %67 = arith.negf %66 : vector<8x64xf32>
    %68 = math.exp %67 : vector<8x64xf32>
    %cst_24 = arith.constant 1.000000e+00 : f32
    %69 = vector.broadcast %cst_24 : f32 to vector<8x64xf32>
    %70 = arith.addf %69, %68 : vector<8x64xf32>
    %71 = arith.divf %69, %70 : vector<8x64xf32>
    %72 = arith.mulf %0, %71 : vector<8x64xf32>
    %cst_25 = arith.constant dense<0.000000e+00> : vector<8xf32>
    %73 = vector.multi_reduction <add>, %72, %cst_25 [1] : vector<8x64xf32> to vector<8xf32>
    %74 = vector.shape_cast %73 : vector<8xf32> to vector<8x1xf32>
    %cst_26 = arith.constant dense<0.000000e+00> : vector<8xf32>
    %75 = vector.multi_reduction <add>, %1, %cst_26 [1] : vector<8x32xf32> to vector<8xf32>
    %76 = vector.shape_cast %75 : vector<8xf32> to vector<8x1xf32>
    %77 = arith.addf %74, %76 : vector<8x1xf32>
    %cst_27 = arith.constant 9.600000e+01 : f32
    %78 = vector.broadcast %cst_27 : f32 to vector<8x1xf32>
    %79 = arith.divf %77, %78 : vector<8x1xf32>
    %80 = vector.broadcast %79 : vector<8x1xf32> to vector<8x64xf32>
    %81 = arith.subf %72, %80 : vector<8x64xf32>
    %82 = vector.broadcast %79 : vector<8x1xf32> to vector<8x32xf32>
    %83 = arith.subf %1, %82 : vector<8x32xf32>
    %84 = arith.mulf %81, %81 : vector<8x64xf32>
    %cst_28 = arith.constant dense<0.000000e+00> : vector<8xf32>
    %85 = vector.multi_reduction <add>, %84, %cst_28 [1] : vector<8x64xf32> to vector<8xf32>
    %86 = vector.shape_cast %85 : vector<8xf32> to vector<8x1xf32>
    %87 = arith.mulf %83, %83 : vector<8x32xf32>
    %cst_29 = arith.constant dense<0.000000e+00> : vector<8xf32>
    %88 = vector.multi_reduction <add>, %87, %cst_29 [1] : vector<8x32xf32> to vector<8xf32>
    %89 = vector.shape_cast %88 : vector<8xf32> to vector<8x1xf32>
    %90 = arith.addf %86, %89 : vector<8x1xf32>
    %cst_30 = arith.constant 9.600000e+01 : f32
    %91 = vector.broadcast %cst_30 : f32 to vector<8x1xf32>
    %92 = arith.divf %90, %91 : vector<8x1xf32>
    %cst_31 = arith.constant 9.99999974E-6 : f32
    %93 = vector.broadcast %cst_31 : f32 to vector<8x1xf32>
    %94 = arith.addf %92, %93 : vector<8x1xf32>
    %95 = math.rsqrt %94 : vector<8x1xf32>
    %96 = vector.broadcast %95 : vector<8x1xf32> to vector<8x64xf32>
    %97 = arith.mulf %81, %96 : vector<8x64xf32>
    %98 = vector.broadcast %9 : vector<1x64xf32> to vector<8x64xf32>
    %99 = arith.mulf %97, %98 : vector<8x64xf32>
    %100 = vector.broadcast %11 : vector<1x64xf32> to vector<8x64xf32>
    %101 = arith.addf %99, %100 : vector<8x64xf32>
    %102 = vector.broadcast %95 : vector<8x1xf32> to vector<8x32xf32>
    %103 = arith.mulf %83, %102 : vector<8x32xf32>
    %104 = vector.broadcast %10 : vector<1x32xf32> to vector<8x32xf32>
    %105 = arith.mulf %103, %104 : vector<8x32xf32>
    %106 = vector.broadcast %12 : vector<1x32xf32> to vector<8x32xf32>
    %107 = arith.addf %105, %106 : vector<8x32xf32>
    %cst_32 = arith.constant dense<0.000000e+00> : vector<8x128xf32>
    %108 = tpu.matmul %101, %19, %cst_32 {dimension_numbers = #tpu.dot_dimension_numbers<[1], [0], [0], [1], [0, 0, 1, 1], [], []>} : vector<8x64xf32>, vector<64x128xf32>, vector<8x128xf32> -> vector<8x128xf32>
    %cst_33 = arith.constant dense<0.000000e+00> : vector<8x128xf32>
    %109 = tpu.matmul %107, %20, %cst_33 {dimension_numbers = #tpu.dot_dimension_numbers<[1], [0], [0], [1], [0, 0, 1, 1], [], []>} : vector<8x32xf32>, vector<32x128xf32>, vector<8x128xf32> -> vector<8x128xf32>
    %110 = arith.addf %108, %109 : vector<8x128xf32>
    %111 = vector.broadcast %13 : vector<1x128xf32> to vector<8x128xf32>
    %112 = arith.addf %110, %111 : vector<8x128xf32>
    %cst_34 = arith.constant 0.000000e+00 : f32
    %113 = vector.broadcast %cst_34 : f32 to vector<8x128xf32>
    %114 = arith.maximumf %112, %113 : vector<8x128xf32>
    %c0_35 = arith.constant 0 : index
    %c0_36 = arith.constant 0 : index
    %115 = vector.load %arg6[%c0_35, %c0_36] : memref<128x64xf32, #tpu.memory_space<vmem>>, vector<128x64xf32>
    %cst_37 = arith.constant dense<0.000000e+00> : vector<8x64xf32>
    %116 = tpu.matmul %114, %115, %cst_37 {dimension_numbers = #tpu.dot_dimension_numbers<[1], [0], [0], [1], [0, 0, 1, 1], [], []>} : vector<8x128xf32>, vector<128x64xf32>, vector<8x64xf32> -> vector<8x64xf32>
    %117 = vector.broadcast %14 : vector<1x64xf32> to vector<8x64xf32>
    %118 = arith.addf %116, %117 : vector<8x64xf32>
    %cst_38 = arith.constant 0.000000e+00 : f32
    %119 = vector.broadcast %cst_38 : f32 to vector<8x64xf32>
    %120 = arith.maximumf %118, %119 : vector<8x64xf32>
    %121 = vector.broadcast %15 : vector<1x64xf32> to vector<8x64xf32>
    %122 = arith.mulf %120, %121 : vector<8x64xf32>
    %cst_39 = arith.constant dense<0.000000e+00> : vector<8xf32>
    %123 = vector.multi_reduction <add>, %122, %cst_39 [1] : vector<8x64xf32> to vector<8xf32>
    %124 = vector.shape_cast %123 : vector<8xf32> to vector<8x1xf32>
    %125 = vector.broadcast %16 : vector<1x1xf32> to vector<8x1xf32>
    %126 = arith.addf %124, %125 : vector<8x1xf32>
    %127 = arith.negf %126 : vector<8x1xf32>
    %128 = math.exp %127 : vector<8x1xf32>
    %cst_40 = arith.constant 1.000000e+00 : f32
    %129 = vector.broadcast %cst_40 : f32 to vector<8x1xf32>
    %130 = arith.addf %129, %128 : vector<8x1xf32>
    %131 = arith.divf %129, %130 : vector<8x1xf32>
    %c0_41 = arith.constant 0 : index
    %c0_42 = arith.constant 0 : index
    %132 = vector.load %arg8[%c0_41, %c0_42] : memref<8x1xf32, #tpu.memory_space<vmem>>, vector<8x1xf32>
    tpu.vector_store %arg8[%c0_41, %c0_42], %131 {strides = array<i32>} : memref<8x1xf32, #tpu.memory_space<vmem>>, vector<8x1xf32>,
    return
  }
  func.func @transform_0(%arg0: i32) -> (i32, i32) {
    %c0_i32 = arith.constant 0 : i32
    %c0_i32_0 = arith.constant 0 : i32
    return %arg0, %c0_i32 : i32, i32
  }
  func.func @transform_1(%arg0: i32) -> (i32, i32) {
    %c0_i32 = arith.constant 0 : i32
    %c0_i32_0 = arith.constant 0 : i32
    return %arg0, %c0_i32 : i32, i32
  }
  func.func @transform_2(%arg0: i32) -> (i32, i32) {
    %c0_i32 = arith.constant 0 : i32
    %c0_i32_0 = arith.constant 0 : i32
    %c0_i32_1 = arith.constant 0 : i32
    return %c0_i32, %c0_i32_0 : i32, i32
  }
  func.func @transform_3(%arg0: i32) -> (i32, i32) {
    %c0_i32 = arith.constant 0 : i32
    %c0_i32_0 = arith.constant 0 : i32
    %c0_i32_1 = arith.constant 0 : i32
    return %c0_i32, %c0_i32_0 : i32, i32
  }
  func.func @transform_4(%arg0: i32) -> (i32, i32) {
    %c0_i32 = arith.constant 0 : i32
    %c0_i32_0 = arith.constant 0 : i32
    %c0_i32_1 = arith.constant 0 : i32
    return %c0_i32, %c0_i32_0 : i32, i32
  }
  func.func @transform_5(%arg0: i32) -> (i32, i32) {
    %c0_i32 = arith.constant 0 : i32
    %c0_i32_0 = arith.constant 0 : i32
    %c0_i32_1 = arith.constant 0 : i32
    return %c0_i32, %c0_i32_0 : i32, i32
  }
  func.func @transform_6(%arg0: i32) -> (i32, i32) {
    %c0_i32 = arith.constant 0 : i32
    %c0_i32_0 = arith.constant 0 : i32
    %c0_i32_1 = arith.constant 0 : i32
    return %c0_i32, %c0_i32_0 : i32, i32
  }
  func.func @transform_7(%arg0: i32) -> (i32, i32) {
    %c0_i32 = arith.constant 0 : i32
    %c0_i32_0 = arith.constant 0 : i32
    return %arg0, %c0_i32 : i32, i32
  }
}

</mosaic_0001>

<llo_original>
// kernel: quality_regressor.1
$region0: #{quality_regressor.1}
  #allocation0 [shape = 'u32[]', space=smem, size = 0x4, offset = 0x4, fixed_abs, tag = 'smem constant byte address 0x4 - core index']
  #allocation1 [shape = 'u32[144,128]{1,0:T(1,128)}', space=vmem, size = 0x12000, scoped, tag = 'internal scratch']
  %s0 = inlined_call_operand.vmem [shape: f32[8,64], index: 0, kind: input, shape index: {}]
  %s1 = inlined_call_operand.vmem [shape: f32[8,32], index: 1, kind: input, shape index: {}]
  %s2 = inlined_call_operand.vmem [shape: f32[96,128], index: 2, kind: input, shape index: {}]
  %s3 = inlined_call_operand.vmem [shape: f32[128,64], index: 3, kind: input, shape index: {}]
  %s4 = inlined_call_operand.vmem [shape: f32[96,128], index: 4, kind: input, shape index: {}]
  %s5 = inlined_call_operand.vmem [shape: f32[128,64], index: 5, kind: input, shape index: {}]
  %s6 = inlined_call_operand.vmem [shape: f32[16,128], index: 6, kind: input, shape index: {}]
  %s7 = inlined_call_operand.vmem [shape: f32[8,1], index: 7, kind: output, shape index: {}]
  %s8 = sld [smem:[#allocation0]]
  $region38: #{quality_regressor.1} parent=0
    _
  %s10 = ssub.s32 1, %s8
  %s11 = scalar_select 0, %s10, %s8
  // Predicated region
  $region2: #{quality_regressor.1} parent=0 // pred_check
    _
  $region3: #{quality_regressor.1} parent=0 // pred_check_branch
    %13 = sbr.rel (0) target = $region5
  $region4: #{quality_regressor.1} parent=0 // pred_region
    _
  $region5: #{quality_regressor.1} parent=0 // pred_fallthru
    _
  // Predicated region
  $region6: #{quality_regressor.1} parent=0 // pred_check
    _
  $region7: #{quality_regressor.1} parent=0 // pred_check_branch
    %15 = sbr.rel (0) target = $region9
  $region8: #{quality_regressor.1} parent=0 // pred_region
    _
  $region9: #{quality_regressor.1} parent=0 // pred_fallthru
    _
  // Predicated region
  $region10: #{quality_regressor.1} parent=0 // pred_check
    _
  $region11: #{quality_regressor.1} parent=0 // pred_check_branch
    %17 = sbr.rel (0) target = $region13
  $region12: #{quality_regressor.1} parent=0 // pred_region
    _
  $region13: #{quality_regressor.1} parent=0 // pred_fallthru
    _
  // Predicated region
  $region14: #{quality_regressor.1} parent=0 // pred_check
    _
  $region15: #{quality_regressor.1} parent=0 // pred_check_branch
    %19 = sbr.rel (0) target = $region17
  $region16: #{quality_regressor.1} parent=0 // pred_region
    _
  $region17: #{quality_regressor.1} parent=0 // pred_fallthru
    _
  // Predicated region
  $region18: #{quality_regressor.1} parent=0 // pred_check
    _
  $region19: #{quality_regressor.1} parent=0 // pred_check_branch
    %21 = sbr.rel (0) target = $region21
  $region20: #{quality_regressor.1} parent=0 // pred_region
    _
  $region21: #{quality_regressor.1} parent=0 // pred_fallthru
    _
  // Predicated region
  $region22: #{quality_regressor.1} parent=0 // pred_check
    _
  $region23: #{quality_regressor.1} parent=0 // pred_check_branch
    %23 = sbr.rel (0) target = $region25
  $region24: #{quality_regressor.1} parent=0 // pred_region
    _
  $region25: #{quality_regressor.1} parent=0 // pred_fallthru
    _
  // Predicated region
  $region26: #{quality_regressor.1} parent=0 // pred_check
    _
  $region27: #{quality_regressor.1} parent=0 // pred_check_branch
    %25 = sbr.rel (0) target = $region29
  $region28: #{quality_regressor.1} parent=0 // pred_region
    _
  $region29: #{quality_regressor.1} parent=0 // pred_fallthru
    _
  %v26 = vld [vmem:[%s0] sm:$0xff]
  %v27 = vld [vmem:[%s1] sm:$0xff]
  %v28 = vld [vmem:[%s6] sm:$0xff]
  %v29 = vld [vmem:[%s6 + $0x8] sm:$0xff]
  %v30 = vld [vmem:[%s2] sm:$0xff]
  %v31 = vld [vmem:[%s2 + $0x8] sm:$0xff]
  %v32 = vld [vmem:[%s2 + $0x10] sm:$0xff]
  %v33 = vld [vmem:[%s2 + $0x18] sm:$0xff]
  %v34 = vld [vmem:[%s2 + $0x20] sm:$0xff]
  %v35 = vld [vmem:[%s2 + $0x28] sm:$0xff]
  %v36 = vld [vmem:[%s2 + $0x30] sm:$0xff]
  %v37 = vld [vmem:[%s2 + $0x38] sm:$0xff]
  %v38 = vld [vmem:[%s2 + $0x40] sm:$0xff]
  %v39 = vld [vmem:[%s2 + $0x48] sm:$0xff]
  %v40 = vld [vmem:[%s2 + $0x50] sm:$0xff]
  %v41 = vld [vmem:[%s2 + $0x58] sm:$0xff]
  %v42 = vld [vmem:[%s4] sm:$0xff]
  %v43 = vld [vmem:[%s4 + $0x8] sm:$0xff]
  %v44 = vld [vmem:[%s4 + $0x10] sm:$0xff]
  %v45 = vld [vmem:[%s4 + $0x18] sm:$0xff]
  %v46 = vld [vmem:[%s4 + $0x20] sm:$0xff]
  %v47 = vld [vmem:[%s4 + $0x28] sm:$0xff]
  %v48 = vld [vmem:[%s4 + $0x30] sm:$0xff]
  %v49 = vld [vmem:[%s4 + $0x38] sm:$0xff]
  %v50 = vld [vmem:[%s4 + $0x40] sm:$0xff]
  %v51 = vld [vmem:[%s4 + $0x48] sm:$0xff]
  %v52 = vld [vmem:[%s4 + $0x50] sm:$0xff]
  %v53 = vld [vmem:[%s4 + $0x58] sm:$0xff]
  %vm54 = vcmask 523264
  %v55 = vsel %vm54, %v26, 0.0
  %56 = vadd.xlane.f32.xlu0 %v55
  %v57 = vpop.xlane.xlu0 %56
  %vm58 = vcmask 261120
  %v59 = vsel %vm58, %v27, 0.0
  %60 = vadd.xlane.f32.xlu0 %v59
  %v61 = vpop.xlane.xlu0 %60
  %v62 = vadd.f32 %v57, %v61
  %v63 = vrcp.pop 96.0
  %v64 = vmul.f32 %v62, %v63
  %v65 = vsub.f32 %v26, %v64
  %v66 = vsub.f32 %v27, %v64
  %v67 = vmul.f32 %v65, %v65
  %v68 = vsel %vm54, %v67, 0.0
  %69 = vadd.xlane.f32.xlu0 %v68
  %v70 = vpop.xlane.xlu0 %69
  %v71 = vmul.f32 %v66, %v66
  %v72 = vsel %vm58, %v71, 0.0
  %73 = vadd.xlane.f32.xlu0 %v72
  %v74 = vpop.xlane.xlu0 %73
  %v75 = vadd.f32 %v70, %v74
  %v76 = vmul.f32 %v75, %v63
  %v77 = vadd.f32 %v76, 1e-05
  %v78 = vrsqrt.pop %v77
  %v79 = vmul.f32 %v65, %v78
  %v80 = vlaneseq
  %v81 = vshrl.u32 %v80, 7
  %v82 = vsub.s32 0, %v81
  %v83 = vrot.slane %v28, %v82
  %v84 = vmul.f32 %v79, %v83
  %v85 = vlaneseq
  %v86 = vshrl.u32 %v85, 7
  %v87 = vsub.s32 2, %v86
  %v88 = vrot.slane %v28, %v87
  %v89 = vadd.f32 %v84, %v88
  %v90 = vmul.f32 %v66, %v78
  %v91 = vlaneseq
  %v92 = vshrl.u32 %v91, 7
  %v93 = vsub.s32 1, %v92
  %v94 = vrot.slane %v28, %v93
  %v95 = vmul.f32 %v90, %v94
  %v96 = vlaneseq
  %v97 = vshrl.u32 %v96, 7
  %v98 = vsub.s32 3, %v97
  %v99 = vrot.slane %v28, %v98
  %v100 = vadd.f32 %v95, %v99
  %v102 = vsel %vm58, %v100, 0
  %104 = vmatprep.subr.mxu0 0.0
  %105 = vmatpush1.msra.mxu0 0.0
  %106 = vmatprep.subr.mxu0 0.0
  %107 = vmatpush1.msra.mxu0 0.0
  %108 = vmatprep.subr.mxu0 0.0
  %109 = vmatpush1.msra.mxu0 0.0
  %110 = vmatprep.subr.mxu0 0.0
  %111 = vmatpush1.msra.mxu0 0.0
  %112 = vmatprep.subr.mxu0 0.0
  %113 = vmatpush1.msra.mxu0 0.0
  %114 = vmatprep.subr.mxu0 0.0
  %115 = vmatpush1.msra.mxu0 0.0
  %116 = vmatprep.subr.mxu0 0.0
  %117 = vmatpush1.msra.mxu0 0.0
  %118 = vmatprep.subr.mxu0 0.0
  %119 = vmatpush1.msra.mxu0 0.0
  %120 = vmatprep.subr.mxu0 0.0
  %121 = vmatpush1.msra.mxu0 0.0
  %122 = vmatprep.subr.mxu0 0.0
  %123 = vmatpush1.msra.mxu0 0.0
  %124 = vmatprep.subr.mxu0 0.0
  %125 = vmatpush1.msra.mxu0 0.0
  %126 = vmatprep.subr.mxu0 0.0
  %127 = vmatpush1.msra.mxu0 0.0
  %128 = vmatprep.subr.mxu0 0.0
  %129 = vmatpush1.msra.mxu0 %v41
  %130 = vmatprep.subr.mxu0 0.0
  %131 = vmatpush1.msra.mxu0 %v40
  %132 = vmatprep.subr.mxu0 0.0
  %133 = vmatpush1.msra.mxu0 %v39
  %134 = vmatprep.subr.mxu0 0.0
  %135 = vmatpush1.msra.mxu0 %v38
  %136 = vmatprep.subr.mxu0 0.0
  %137 = vmatpush2.msra.mxu0 0.0
  %138 = vmatprep.subr.mxu0 0.0
  %139 = vmatpush2.msra.mxu0 0.0
  %140 = vmatprep.subr.mxu0 0.0
  %141 = vmatpush2.msra.mxu0 0.0
  %142 = vmatprep.subr.mxu0 0.0
  %143 = vmatpush2.msra.mxu0 0.0
  %144 = vmatprep.subr.mxu0 0.0
  %145 = vmatpush2.msra.mxu0 0.0
  %146 = vmatprep.subr.mxu0 0.0
  %147 = vmatpush2.msra.mxu0 0.0
  %148 = vmatprep.subr.mxu0 0.0
  %149 = vmatpush2.msra.mxu0 0.0
  %150 = vmatprep.subr.mxu0 0.0
  %151 = vmatpush2.msra.mxu0 0.0
  %152 = vmatprep.subr.mxu0 0.0
  %153 = vmatpush2.msra.mxu0 0.0
  %154 = vmatprep.subr.mxu0 0.0
  %155 = vmatpush2.msra.mxu0 0.0
  %156 = vmatprep.subr.mxu0 0.0
  %157 = vmatpush2.msra.mxu0 0.0
  %158 = vmatprep.subr.mxu0 0.0
  %159 = vmatpush2.msra.mxu0 0.0
  %160 = vmatprep.subr.mxu0 0.0
  %161 = vmatpush2.msra.mxu0 0.0
  %162 = vmatprep.subr.mxu0 0.0
  %163 = vmatpush2.msra.mxu0 0.0
  %164 = vmatprep.subr.mxu0 0.0
  %165 = vmatpush2.msra.mxu0 0.0
  %166 = vmatprep.subr.mxu0 0.0
  %167 = vmatpush2.msra.mxu0 0.0
  %168 = vmatprep.mubr.f32.mxu0 0.0
  %169 = vmatmul.mubr.f32.gmra.mxu0 %v102
  %v170 = vpop.f32.mrf.mxu0
  %v171 = vadd.f32 0.0, %v170
  %v172 = vpop.f32.mrf.mxu0
  %173 = vdwg.mxu0
  %v175 = vsel %vm54, %v89, 0
  %177 = vmatprep.subr.mxu0 0.0
  %178 = vmatpush1.msra.mxu0 0.0
  %179 = vmatprep.subr.mxu0 0.0
  %180 = vmatpush1.msra.mxu0 0.0
  %181 = vmatprep.subr.mxu0 0.0
  %182 = vmatpush1.msra.mxu0 0.0
  %183 = vmatprep.subr.mxu0 0.0
  %184 = vmatpush1.msra.mxu0 0.0
  %185 = vmatprep.subr.mxu0 0.0
  %186 = vmatpush1.msra.mxu0 0.0
  %187 = vmatprep.subr.mxu0 0.0
  %188 = vmatpush1.msra.mxu0 0.0
  %189 = vmatprep.subr.mxu0 0.0
  %190 = vmatpush1.msra.mxu0 0.0
  %191 = vmatprep.subr.mxu0 0.0
  %192 = vmatpush1.msra.mxu0 0.0
  %193 = vmatprep.subr.mxu0 0.0
  %194 = vmatpush1.msra.mxu0 %v37
  %195 = vmatprep.subr.mxu0 0.0
  %196 = vmatpush1.msra.mxu0 %v36
  %197 = vmatprep.subr.mxu0 0.0
  %198 = vmatpush1.msra.mxu0 %v35
  %199 = vmatprep.subr.mxu0 0.0
  %200 = vmatpush1.msra.mxu0 %v34
  %201 = vmatprep.subr.mxu0 0.0
  %202 = vmatpush1.msra.mxu0 %v33
  %203 = vmatprep.subr.mxu0 0.0
  %204 = vmatpush1.msra.mxu0 %v32
  %205 = vmatprep.subr.mxu0 0.0
  %206 = vmatpush1.msra.mxu0 %v31
  %207 = vmatprep.subr.mxu0 0.0
  %208 = vmatpush1.msra.mxu0 %v30
  %209 = vmatprep.subr.mxu0 0.0
  %210 = vmatpush2.msra.mxu0 0.0
  %211 = vmatprep.subr.mxu0 0.0
  %212 = vmatpush2.msra.mxu0 0.0
  %213 = vmatprep.subr.mxu0 0.0
  %214 = vmatpush2.msra.mxu0 0.0
  %215 = vmatprep.subr.mxu0 0.0
  %216 = vmatpush2.msra.mxu0 0.0
  %217 = vmatprep.subr.mxu0 0.0
  %218 = vmatpush2.msra.mxu0 0.0
  %219 = vmatprep.subr.mxu0 0.0
  %220 = vmatpush2.msra.mxu0 0.0
  %221 = vmatprep.subr.mxu0 0.0
  %222 = vmatpush2.msra.mxu0 0.0
  %223 = vmatprep.subr.mxu0 0.0
  %224 = vmatpush2.msra.mxu0 0.0
  %225 = vmatprep.subr.mxu0 0.0
  %226 = vmatpush2.msra.mxu0 0.0
  %227 = vmatprep.subr.mxu0 0.0
  %228 = vmatpush2.msra.mxu0 0.0
  %229 = vmatprep.subr.mxu0 0.0
  %230 = vmatpush2.msra.mxu0 0.0
  %231 = vmatprep.subr.mxu0 0.0
  %232 = vmatpush2.msra.mxu0 0.0
  %233 = vmatprep.subr.mxu0 0.0
  %234 = vmatpush2.msra.mxu0 0.0
  %235 = vmatprep.subr.mxu0 0.0
  %236 = vmatpush2.msra.mxu0 0.0
  %237 = vmatprep.subr.mxu0 0.0
  %238 = vmatpush2.msra.mxu0 0.0
  %239 = vmatprep.subr.mxu0 0.0
  %240 = vmatpush2.msra.mxu0 0.0
  %241 = vmatprep.mubr.f32.mxu0 0.0
  %242 = vmatmul.mubr.f32.gmra.mxu0 %v175
  %v243 = vpop.f32.mrf.mxu0
  %v244 = vadd.f32 %v171, %v243
  %v245 = vpop.f32.mrf.mxu0
  %246 = vdwg.mxu0
  %v247 = vlaneseq
  %v248 = vshrl.u32 %v247, 7
  %v249 = vsub.s32 4, %v248
  %v250 = vrot.slane %v28, %v249
  %v251 = vadd.f32 %v244, %v250
  %v252 = vmax.f32 %v251, 0.0
  %v253 = vld [vmem:[%s3] sm:$0xff]
  %v254 = vld [vmem:[%s3 + $0x8] sm:$0xff]
  %v255 = vld [vmem:[%s3 + $0x10] sm:$0xff]
  %v256 = vld [vmem:[%s3 + $0x18] sm:$0xff]
  %v257 = vld [vmem:[%s3 + $0x20] sm:$0xff]
  %v258 = vld [vmem:[%s3 + $0x28] sm:$0xff]
  %v259 = vld [vmem:[%s3 + $0x30] sm:$0xff]
  %v260 = vld [vmem:[%s3 + $0x38] sm:$0xff]
  %v261 = vld [vmem:[%s3 + $0x40] sm:$0xff]
  %v262 = vld [vmem:[%s3 + $0x48] sm:$0xff]
  %v263 = vld [vmem:[%s3 + $0x50] sm:$0xff]
  %v264 = vld [vmem:[%s3 + $0x58] sm:$0xff]
  %v265 = vld [vmem:[%s3 + $0x60] sm:$0xff]
  %v266 = vld [vmem:[%s3 + $0x68] sm:$0xff]
  %v267 = vld [vmem:[%s3 + $0x70] sm:$0xff]
  %v268 = vld [vmem:[%s3 + $0x78] sm:$0xff]
  %v269 = vlaneseq
  %v270 = vshrl.u32 %v269, 7
  %v271 = vsub.s32 5, %v270
  %v272 = vrot.slane %v28, %v271
  %273 = vmatprep.subr.mxu0 0.0
  %274 = vmatpush1.msra.mxu0 %v268
  %275 = vmatprep.subr.mxu0 0.0
  %276 = vmatpush1.msra.mxu0 %v267
  %277 = vmatprep.subr.mxu0 0.0
  %278 = vmatpush1.msra.mxu0 %v266
  %279 = vmatprep.subr.mxu0 0.0
  %280 = vmatpush1.msra.mxu0 %v265
  %281 = vmatprep.subr.mxu0 0.0
  %282 = vmatpush1.msra.mxu0 %v264
  %283 = vmatprep.subr.mxu0 0.0
  %284 = vmatpush1.msra.mxu0 %v263
  %285 = vmatprep.subr.mxu0 0.0
  %286 = vmatpush1.msra.mxu0 %v262
  %287 = vmatprep.subr.mxu0 0.0
  %288 = vmatpush1.msra.mxu0 %v261
  %289 = vmatprep.subr.mxu0 0.0
  %290 = vmatpush1.msra.mxu0 %v260
  %291 = vmatprep.subr.mxu0 0.0
  %292 = vmatpush1.msra.mxu0 %v259
  %293 = vmatprep.subr.mxu0 0.0
  %294 = vmatpush1.msra.mxu0 %v258
  %295 = vmatprep.subr.mxu0 0.0
  %296 = vmatpush1.msra.mxu0 %v257
  %297 = vmatprep.subr.mxu0 0.0
  %298 = vmatpush1.msra.mxu0 %v256
  %299 = vmatprep.subr.mxu0 0.0
  %300 = vmatpush1.msra.mxu0 %v255
  %301 = vmatprep.subr.mxu0 0.0
  %302 = vmatpush1.msra.mxu0 %v254
  %303 = vmatprep.subr.mxu0 0.0
  %304 = vmatpush1.msra.mxu0 %v253
  %305 = vmatprep.subr.mxu0 0.0
  %306 = vmatpush2.msra.mxu0 0.0
  %307 = vmatprep.subr.mxu0 0.0
  %308 = vmatpush2.msra.mxu0 0.0
  %309 = vmatprep.subr.mxu0 0.0
  %310 = vmatpush2.msra.mxu0 0.0
  %311 = vmatprep.subr.mxu0 0.0
  %312 = vmatpush2.msra.mxu0 0.0
  %313 = vmatprep.subr.mxu0 0.0
  %314 = vmatpush2.msra.mxu0 0.0
  %315 = vmatprep.subr.mxu0 0.0
  %316 = vmatpush2.msra.mxu0 0.0
  %317 = vmatprep.subr.mxu0 0.0
  %318 = vmatpush2.msra.mxu0 0.0
  %319 = vmatprep.subr.mxu0 0.0
  %320 = vmatpush2.msra.mxu0 0.0
  %321 = vmatprep.subr.mxu0 0.0
  %322 = vmatpush2.msra.mxu0 0.0
  %323 = vmatprep.subr.mxu0 0.0
  %324 = vmatpush2.msra.mxu0 0.0
  %325 = vmatprep.subr.mxu0 0.0
  %326 = vmatpush2.msra.mxu0 0.0
  %327 = vmatprep.subr.mxu0 0.0
  %328 = vmatpush2.msra.mxu0 0.0
  %329 = vmatprep.subr.mxu0 0.0
  %330 = vmatpush2.msra.mxu0 0.0
  %331 = vmatprep.subr.mxu0 0.0
  %332 = vmatpush2.msra.mxu0 0.0
  %333 = vmatprep.subr.mxu0 0.0
  %334 = vmatpush2.msra.mxu0 0.0
  %335 = vmatprep.subr.mxu0 0.0
  %336 = vmatpush2.msra.mxu0 0.0
  %337 = vmatprep.mubr.f32.mxu0 0.0
  %338 = vmatmul.mubr.f32.gmra.mxu0 %v252
  %v339 = vpop.f32.mrf.mxu0
  %v340 = vadd.f32 %v272, %v339
  %v341 = vpop.f32.mrf.mxu0
  %342 = vdwg.mxu0
  %v343 = vxor.u32 %v340, 2147483648
  %v344 = vmul.f32 %v343, 1.442695
  %v345 = vpow.pop %v344
  %v346 = vadd.f32 %v345, 1.0
  %v347 = vrcp.pop %v346
  %v348 = vmul.f32 1.0, %v347
  %v349 = vmul.f32 %v26, %v348
  %v350 = vsel %vm54, %v349, 0.0
  %351 = vadd.xlane.f32.xlu0 %v350
  %v352 = vpop.xlane.xlu0 %351
  %v353 = vadd.f32 %v352, %v61
  %v354 = vmul.f32 %v353, %v63
  %v355 = vsub.f32 %v349, %v354
  %v356 = vsub.f32 %v27, %v354
  %v357 = vmul.f32 %v355, %v355
  %v358 = vsel %vm54, %v357, 0.0
  %359 = vadd.xlane.f32.xlu0 %v358
  %v360 = vpop.xlane.xlu0 %359
  %v361 = vmul.f32 %v356, %v356
  %v362 = vsel %vm58, %v361, 0.0
  %363 = vadd.xlane.f32.xlu0 %v362
  %v364 = vpop.xlane.xlu0 %363
  %v365 = vadd.f32 %v360, %v364
  %v366 = vmul.f32 %v365, %v63
  %v367 = vadd.f32 %v366, 1e-05
  %v368 = vrsqrt.pop %v367
  %v369 = vmul.f32 %v355, %v368
  %v370 = vlaneseq
  %v371 = vshrl.u32 %v370, 7
  %v372 = vsub.s32 6, %v371
  %v373 = vrot.slane %v28, %v372
  %v374 = vmul.f32 %v369, %v373
  %v375 = vlaneseq
  %v376 = vshrl.u32 %v375, 7
  %v377 = vsub.s32 0, %v376
  %v378 = vrot.slane %v29, %v377
  %v379 = vadd.f32 %v374, %v378
  %v380 = vmul.f32 %v356, %v368
  %v381 = vlaneseq
  %v382 = vshrl.u32 %v381, 7
  %v383 = vsub.s32 7, %v382
  %v384 = vrot.slane %v28, %v383
  %v385 = vmul.f32 %v380, %v384
  %v386 = vlaneseq
  %v387 = vshrl.u32 %v386, 7
  %v388 = vsub.s32 1, %v387
  %v389 = vrot.slane %v29, %v388
  %v390 = vadd.f32 %v385, %v389
  %v392 = vsel %vm58, %v390, 0
  %394 = vmatprep.subr.mxu0 0.0
  %395 = vmatpush1.msra.mxu0 0.0
  %396 = vmatprep.subr.mxu0 0.0
  %397 = vmatpush1.msra.mxu0 0.0
  %398 = vmatprep.subr.mxu0 0.0
  %399 = vmatpush1.msra.mxu0 0.0
  %400 = vmatprep.subr.mxu0 0.0
  %401 = vmatpush1.msra.mxu0 0.0
  %402 = vmatprep.subr.mxu0 0.0
  %403 = vmatpush1.msra.mxu0 0.0
  %404 = vmatprep.subr.mxu0 0.0
  %405 = vmatpush1.msra.mxu0 0.0
  %406 = vmatprep.subr.mxu0 0.0
  %407 = vmatpush1.msra.mxu0 0.0
  %408 = vmatprep.subr.mxu0 0.0
  %409 = vmatpush1.msra.mxu0 0.0
  %410 = vmatprep.subr.mxu0 0.0
  %411 = vmatpush1.msra.mxu0 0.0
  %412 = vmatprep.subr.mxu0 0.0
  %413 = vmatpush1.msra.mxu0 0.0
  %414 = vmatprep.subr.mxu0 0.0
  %415 = vmatpush1.msra.mxu0 0.0
  %416 = vmatprep.subr.mxu0 0.0
  %417 = vmatpush1.msra.mxu0 0.0
  %418 = vmatprep.subr.mxu0 0.0
  %419 = vmatpush1.msra.mxu0 %v53
  %420 = vmatprep.subr.mxu0 0.0
  %421 = vmatpush1.msra.mxu0 %v52
  %422 = vmatprep.subr.mxu0 0.0
  %423 = vmatpush1.msra.mxu0 %v51
  %424 = vmatprep.subr.mxu0 0.0
  %425 = vmatpush1.msra.mxu0 %v50
  %426 = vmatprep.subr.mxu0 0.0
  %427 = vmatpush2.msra.mxu0 0.0
  %428 = vmatprep.subr.mxu0 0.0
  %429 = vmatpush2.msra.mxu0 0.0
  %430 = vmatprep.subr.mxu0 0.0
  %431 = vmatpush2.msra.mxu0 0.0
  %432 = vmatprep.subr.mxu0 0.0
  %433 = vmatpush2.msra.mxu0 0.0
  %434 = vmatprep.subr.mxu0 0.0
  %435 = vmatpush2.msra.mxu0 0.0
  %436 = vmatprep.subr.mxu0 0.0
  %437 = vmatpush2.msra.mxu0 0.0
  %438 = vmatprep.subr.mxu0 0.0
  %439 = vmatpush2.msra.mxu0 0.0
  %440 = vmatprep.subr.mxu0 0.0
  %441 = vmatpush2.msra.mxu0 0.0
  %442 = vmatprep.subr.mxu0 0.0
  %443 = vmatpush2.msra.mxu0 0.0
  %444 = vmatprep.subr.mxu0 0.0
  %445 = vmatpush2.msra.mxu0 0.0
  %446 = vmatprep.subr.mxu0 0.0
  %447 = vmatpush2.msra.mxu0 0.0
  %448 = vmatprep.subr.mxu0 0.0
  %449 = vmatpush2.msra.mxu0 0.0
  %450 = vmatprep.subr.mxu0 0.0
  %451 = vmatpush2.msra.mxu0 0.0
  %452 = vmatprep.subr.mxu0 0.0
  %453 = vmatpush2.msra.mxu0 0.0
  %454 = vmatprep.subr.mxu0 0.0
  %455 = vmatpush2.msra.mxu0 0.0
  %456 = vmatprep.subr.mxu0 0.0
  %457 = vmatpush2.msra.mxu0 0.0
  %458 = vmatprep.mubr.f32.mxu0 0.0
  %459 = vmatmul.mubr.f32.gmra.mxu0 %v392
  %v460 = vpop.f32.mrf.mxu0
  %v461 = vadd.f32 0.0, %v460
  %v462 = vpop.f32.mrf.mxu0
  %463 = vdwg.mxu0
  %v465 = vsel %vm54, %v379, 0
  %467 = vmatprep.subr.mxu0 0.0
  %468 = vmatpush1.msra.mxu0 0.0
  %469 = vmatprep.subr.mxu0 0.0
  %470 = vmatpush1.msra.mxu0 0.0
  %471 = vmatprep.subr.mxu0 0.0
  %472 = vmatpush1.msra.mxu0 0.0
  %473 = vmatprep.subr.mxu0 0.0
  %474 = vmatpush1.msra.mxu0 0.0
  %475 = vmatprep.subr.mxu0 0.0
  %476 = vmatpush1.msra.mxu0 0.0
  %477 = vmatprep.subr.mxu0 0.0
  %478 = vmatpush1.msra.mxu0 0.0
  %479 = vmatprep.subr.mxu0 0.0
  %480 = vmatpush1.msra.mxu0 0.0
  %481 = vmatprep.subr.mxu0 0.0
  %482 = vmatpush1.msra.mxu0 0.0
  %483 = vmatprep.subr.mxu0 0.0
  %484 = vmatpush1.msra.mxu0 %v49
  %485 = vmatprep.subr.mxu0 0.0
  %486 = vmatpush1.msra.mxu0 %v48
  %487 = vmatprep.subr.mxu0 0.0
  %488 = vmatpush1.msra.mxu0 %v47
  %489 = vmatprep.subr.mxu0 0.0
  %490 = vmatpush1.msra.mxu0 %v46
  %491 = vmatprep.subr.mxu0 0.0
  %492 = vmatpush1.msra.mxu0 %v45
  %493 = vmatprep.subr.mxu0 0.0
  %494 = vmatpush1.msra.mxu0 %v44
  %495 = vmatprep.subr.mxu0 0.0
  %496 = vmatpush1.msra.mxu0 %v43
  %497 = vmatprep.subr.mxu0 0.0
  %498 = vmatpush1.msra.mxu0 %v42
  %499 = vmatprep.subr.mxu0 0.0
  %500 = vmatpush2.msra.mxu0 0.0
  %501 = vmatprep.subr.mxu0 0.0
  %502 = vmatpush2.msra.mxu0 0.0
  %503 = vmatprep.subr.mxu0 0.0
  %504 = vmatpush2.msra.mxu0 0.0
  %505 = vmatprep.subr.mxu0 0.0
  %506 = vmatpush2.msra.mxu0 0.0
  %507 = vmatprep.subr.mxu0 0.0
  %508 = vmatpush2.msra.mxu0 0.0
  %509 = vmatprep.subr.mxu0 0.0
  %510 = vmatpush2.msra.mxu0 0.0
  %511 = vmatprep.subr.mxu0 0.0
  %512 = vmatpush2.msra.mxu0 0.0
  %513 = vmatprep.subr.mxu0 0.0
  %514 = vmatpush2.msra.mxu0 0.0
  %515 = vmatprep.subr.mxu0 0.0
  %516 = vmatpush2.msra.mxu0 0.0
  %517 = vmatprep.subr.mxu0 0.0
  %518 = vmatpush2.msra.mxu0 0.0
  %519 = vmatprep.subr.mxu0 0.0
  %520 = vmatpush2.msra.mxu0 0.0
  %521 = vmatprep.subr.mxu0 0.0
  %522 = vmatpush2.msra.mxu0 0.0
  %523 = vmatprep.subr.mxu0 0.0
  %524 = vmatpush2.msra.mxu0 0.0
  %525 = vmatprep.subr.mxu0 0.0
  %526 = vmatpush2.msra.mxu0 0.0
  %527 = vmatprep.subr.mxu0 0.0
  %528 = vmatpush2.msra.mxu0 0.0
  %529 = vmatprep.subr.mxu0 0.0
  %530 = vmatpush2.msra.mxu0 0.0
  %531 = vmatprep.mubr.f32.mxu0 0.0
  %532 = vmatmul.mubr.f32.gmra.mxu0 %v465
  %v533 = vpop.f32.mrf.mxu0
  %v534 = vadd.f32 %v461, %v533
  %v535 = vpop.f32.mrf.mxu0
  %536 = vdwg.mxu0
  %v537 = vlaneseq
  %v538 = vshrl.u32 %v537, 7
  %v539 = vsub.s32 2, %v538
  %v540 = vrot.slane %v29, %v539
  %v541 = vadd.f32 %v534, %v540
  %v542 = vmax.f32 %v541, 0.0
  %v543 = vld [vmem:[%s5] sm:$0xff]
  %v544 = vld [vmem:[%s5 + $0x8] sm:$0xff]
  %v545 = vld [vmem:[%s5 + $0x10] sm:$0xff]
  %v546 = vld [vmem:[%s5 + $0x18] sm:$0xff]
  %v547 = vld [vmem:[%s5 + $0x20] sm:$0xff]
  %v548 = vld [vmem:[%s5 + $0x28] sm:$0xff]
  %v549 = vld [vmem:[%s5 + $0x30] sm:$0xff]
  %v550 = vld [vmem:[%s5 + $0x38] sm:$0xff]
  %v551 = vld [vmem:[%s5 + $0x40] sm:$0xff]
  %v552 = vld [vmem:[%s5 + $0x48] sm:$0xff]
  %v553 = vld [vmem:[%s5 + $0x50] sm:$0xff]
  %v554 = vld [vmem:[%s5 + $0x58] sm:$0xff]
  %v555 = vld [vmem:[%s5 + $0x60] sm:$0xff]
  %v556 = vld [vmem:[%s5 + $0x68] sm:$0xff]
  %v557 = vld [vmem:[%s5 + $0x70] sm:$0xff]
  %v558 = vld [vmem:[%s5 + $0x78] sm:$0xff]
  %v559 = vlaneseq
  %v560 = vshrl.u32 %v559, 7
  %v561 = vsub.s32 3, %v560
  %v562 = vrot.slane %v29, %v561
  %563 = vmatprep.subr.mxu0 0.0
  %564 = vmatpush1.msra.mxu0 %v558
  %565 = vmatprep.subr.mxu0 0.0
  %566 = vmatpush1.msra.mxu0 %v557
  %567 = vmatprep.subr.mxu0 0.0
  %568 = vmatpush1.msra.mxu0 %v556
  %569 = vmatprep.subr.mxu0 0.0
  %570 = vmatpush1.msra.mxu0 %v555
  %571 = vmatprep.subr.mxu0 0.0
  %572 = vmatpush1.msra.mxu0 %v554
  %573 = vmatprep.subr.mxu0 0.0
  %574 = vmatpush1.msra.mxu0 %v553
  %575 = vmatprep.subr.mxu0 0.0
  %576 = vmatpush1.msra.mxu0 %v552
  %577 = vmatprep.subr.mxu0 0.0
  %578 = vmatpush1.msra.mxu0 %v551
  %579 = vmatprep.subr.mxu0 0.0
  %580 = vmatpush1.msra.mxu0 %v550
  %581 = vmatprep.subr.mxu0 0.0
  %582 = vmatpush1.msra.mxu0 %v549
  %583 = vmatprep.subr.mxu0 0.0
  %584 = vmatpush1.msra.mxu0 %v548
  %585 = vmatprep.subr.mxu0 0.0
  %586 = vmatpush1.msra.mxu0 %v547
  %587 = vmatprep.subr.mxu0 0.0
  %588 = vmatpush1.msra.mxu0 %v546
  %589 = vmatprep.subr.mxu0 0.0
  %590 = vmatpush1.msra.mxu0 %v545
  %591 = vmatprep.subr.mxu0 0.0
  %592 = vmatpush1.msra.mxu0 %v544
  %593 = vmatprep.subr.mxu0 0.0
  %594 = vmatpush1.msra.mxu0 %v543
  %595 = vmatprep.subr.mxu0 0.0
  %596 = vmatpush2.msra.mxu0 0.0
  %597 = vmatprep.subr.mxu0 0.0
  %598 = vmatpush2.msra.mxu0 0.0
  %599 = vmatprep.subr.mxu0 0.0
  %600 = vmatpush2.msra.mxu0 0.0
  %601 = vmatprep.subr.mxu0 0.0
  %602 = vmatpush2.msra.mxu0 0.0
  %603 = vmatprep.subr.mxu0 0.0
  %604 = vmatpush2.msra.mxu0 0.0
  %605 = vmatprep.subr.mxu0 0.0
  %606 = vmatpush2.msra.mxu0 0.0
  %607 = vmatprep.subr.mxu0 0.0
  %608 = vmatpush2.msra.mxu0 0.0
  %609 = vmatprep.subr.mxu0 0.0
  %610 = vmatpush2.msra.mxu0 0.0
  %611 = vmatprep.subr.mxu0 0.0
  %612 = vmatpush2.msra.mxu0 0.0
  %613 = vmatprep.subr.mxu0 0.0
  %614 = vmatpush2.msra.mxu0 0.0
  %615 = vmatprep.subr.mxu0 0.0
  %616 = vmatpush2.msra.mxu0 0.0
  %617 = vmatprep.subr.mxu0 0.0
  %618 = vmatpush2.msra.mxu0 0.0
  %619 = vmatprep.subr.mxu0 0.0
  %620 = vmatpush2.msra.mxu0 0.0
  %621 = vmatprep.subr.mxu0 0.0
  %622 = vmatpush2.msra.mxu0 0.0
  %623 = vmatprep.subr.mxu0 0.0
  %624 = vmatpush2.msra.mxu0 0.0
  %625 = vmatprep.subr.mxu0 0.0
  %626 = vmatpush2.msra.mxu0 0.0
  %627 = vmatprep.mubr.f32.mxu0 0.0
  %628 = vmatmul.mubr.f32.gmra.mxu0 %v542
  %v629 = vpop.f32.mrf.mxu0
  %v630 = vadd.f32 %v562, %v629
  %v631 = vpop.f32.mrf.mxu0
  %632 = vdwg.mxu0
  %v633 = vmax.f32 %v630, 0.0
  %v634 = vlaneseq
  %v635 = vshrl.u32 %v634, 7
  %v636 = vsub.s32 4, %v635
  %v637 = vrot.slane %v29, %v636
  %v638 = vmul.f32 %v633, %v637
  %v639 = vsel %vm54, %v638, 0.0
  %640 = vadd.xlane.f32.xlu0 %v639
  %v641 = vpop.xlane.xlu0 %640
  %v642 = vlaneseq
  %v643 = vshrl.u32 %v642, 7
  %v644 = vsub.s32 5, %v643
  %v645 = vrot.slane %v29, %v644
  %v646 = vadd.f32 %v641, %v645
  %v647 = vxor.u32 %v646, 2147483648
  %v648 = vmul.f32 %v647, 1.442695
  %v649 = vpow.pop %v648
  %v650 = vadd.f32 %v649, 1.0
  %v651 = vrcp.pop %v650
  %v652 = vmul.f32 1.0, %v651
  %vm653 = vcmask 7168
  %654 = vst.msk [vmem:[%s7] sm:$0xff] %vm653, %v652
  // Predicated region
  $region30: #{quality_regressor.1} parent=0 // pred_check
    _
  $region31: #{quality_regressor.1} parent=0 // pred_check_branch
    %656 = sbr.rel (0) target = $region33
  $region32: #{quality_regressor.1} parent=0 // pred_region
    _
  $region33: #{quality_regressor.1} parent=0 // pred_fallthru
    _
  // Predicated region
  $region34: #{quality_regressor.1} parent=0 // pred_check
    _
  $region35: #{quality_regressor.1} parent=0 // pred_check_branch
    %658 = sbr.rel (0) target = $region37
  $region36: #{quality_regressor.1} parent=0 // pred_region
    _
  $region37: #{quality_regressor.1} parent=0 // pred_fallthru
    _

</llo_original>
